<compile_context>
chip_gen: v5e
topology: v5e:2x2
jax: 0.10.0
libtpu: 0.0.40
codegen_flags: <defaults>
</compile_context>

<pallas_src>
import jax
import jax.numpy as jnp
from jax.experimental import pallas as pl
from jax.experimental.pallas import tpu as pltpu


def _minmax_kernel(x_ref, p_ref, o_ref):
    x = x_ref[...].astype(jnp.float32)
    p = p_ref[...]                  # (3, tn) f32: row 0 = scale, 1 = min, 2 = new_min
    scale = p[0:1, :]               # (1, tn) -> broadcasts over rows
    mn = p[1:2, :]
    new_mn = p[2:3, :]
    o_ref[...] = ((x - mn) * scale + new_mn).astype(o_ref.dtype)


def _choose_tiles(B, D, itemsize):
    """Pick (tm, tn): lane-dense, VMEM-safe blocks with enough grid steps."""
    # Sublane pack per dtype: 8 (f32), 16 (bf16/f16), 32 (int8/fp8).
    pack = max(8, 32 // max(1, itemsize))

    # Lane tile: full D when small, otherwise 2048 (128-multiple); boundary
    # column blocks (when D % tn != 0) are masked -- no power-of-two decay.
    tn = 2048 if D > 2048 else D
    nd = pl.cdiv(D, tn)
    row_bytes = tn * itemsize

    # Row tile: largest multiple of `pack` with one x block <= ~4 MiB,
    # clamped to the (pack-rounded) batch.
    target_block_bytes = 4 * 1024 * 1024
    tm = max(pack, (target_block_bytes // max(1, row_bytes)) // pack * pack)
    b_round = pl.cdiv(B, pack) * pack
    tm = min(tm, b_round)

    # Ensure enough grid steps for pipelining + megacore sharding, but don't
    # let blocks decay much below ~1 MiB (per-step overhead matters on v7x).
    TARGET_STEPS = 8
    MIN_BLOCK_BYTES = 1 << 20
    while pl.cdiv(B, tm) * nd < TARGET_STEPS:
        new_tm = (tm // 2) // pack * pack
        if new_tm < pack or new_tm * row_bytes < MIN_BLOCK_BYTES:
            break
        if pl.cdiv(B, new_tm) * nd == pl.cdiv(B, tm) * nd:
            break
        tm = new_tm

    return tm, tn


def minmax_standardize(x, mn, mx, new_mn, new_mx):
    """Elementwise min/max re-scaling of x: [B, D]; params: [D]."""
    B, D = x.shape
    itemsize = jnp.dtype(x.dtype).itemsize
    tm, tn = _choose_tiles(B, D, itemsize)
    nb = pl.cdiv(B, tm)
    nd = pl.cdiv(D, tn)

    # --- fold the param vectors: scale + (min, new_min), stacked as (3, D) f32 ---
    mn_f = mn.astype(jnp.float32).reshape(1, D)
    mx_f = mx.astype(jnp.float32).reshape(1, D)
    nmn_f = new_mn.astype(jnp.float32).reshape(1, D)
    nmx_f = new_mx.astype(jnp.float32).reshape(1, D)
    scale = (nmx_f - nmn_f) / (mx_f - mn_f)   # max == min -> inf/nan, same as PyTorch
    params = jnp.concatenate([scale, mn_f, nmn_f], axis=0)   # (3, D)

    # VMEM budget: double-buffered (in block + out block) + param blocks + headroom,
    # capped at 32 MiB (safe across v5e / v6e / v7x).
    block_bytes = tm * tn * itemsize
    vmem_need = 2 * (2 * block_bytes) + 2 * (3 * tn * 4) + (4 << 20)
    vmem_limit = int(min(32 << 20, max(16 << 20, vmem_need)))

    cost = pl.CostEstimate(
        flops=3 * B * D,
        transcendentals=0,
        bytes_accessed=2 * B * D * itemsize + 3 * D * 4,
    )

    return pl.pallas_call(
        _minmax_kernel,
        out_shape=jax.ShapeDtypeStruct((B, D), x.dtype),
        grid_spec=pltpu.PrefetchScalarGridSpec(
            num_scalar_prefetch=0,
            grid=(nb, nd),
            in_specs=[
                pl.BlockSpec((tm, tn), lambda i, j: (i, j)),
                pl.BlockSpec((3, tn), lambda i, j: (0, j)),
            ],
            out_specs=pl.BlockSpec((tm, tn), lambda i, j: (i, j)),
        ),
        compiler_params=pltpu.CompilerParams(
            dimension_semantics=("parallel", "parallel"),
            vmem_limit_bytes=vmem_limit,
        ),
        cost_estimate=cost,
    )(x, params)


if __name__ == "__main__":
    key = jax.random.PRNGKey(0)
    ok = True

    # Aligned batch, ragged batch (masked row boundary), non-128 feature dim,
    # and a wide-D case that exercises tn=2048 with a masked column boundary.
    for (B, D) in ((16, 128), (13, 128), (13, 96), (8, 2176)):
        k = jax.random.fold_in(key, B * 10007 + D)

        # Deterministic "buffers" (analogous to the module's registered buffers).
        mn = jnp.linspace(-2.0, -1.0, D, dtype=jnp.float32)     # prior lower bounds
        mx = jnp.linspace(1.0, 3.0, D, dtype=jnp.float32)       # prior upper bounds
        new_mn = jnp.full((D,), -1.0, dtype=jnp.float32)        # target lower bound
        new_mx = jnp.full((D,), 1.0, dtype=jnp.float32)         # target upper bound

        x = jax.random.uniform(k, (B, D), dtype=jnp.float32,
                               minval=-2.0, maxval=3.0)

        out = jax.block_until_ready(minmax_standardize(x, mn, mx, new_mn, new_mx))

        # Pure-JAX reference (same math as standardize_minmax).
        ref = (x - mn) / (mx - mn) * (new_mx - new_mn) + new_mn
        ok &= (out.shape == x.shape and out.dtype == x.dtype)
        ok &= bool(jnp.allclose(out, ref, rtol=1e-5, atol=1e-5))

    assert ok
    print("KERNEL_OK")
</pallas_src>

<mosaic_0001>
module attributes {stable_mosaic.version = 11 : i64} {
  func.func @_minmax_kernel(%arg0: i32, %arg1: i32, %arg2: memref<16x128xf32, #tpu.memory_space<vmem>>, %arg3: memref<3x128xf32, #tpu.memory_space<vmem>>, %arg4: memref<16x128xf32, #tpu.memory_space<vmem>>) attributes {dimension_semantics = [#tpu.dimension_semantics<parallel>, #tpu.dimension_semantics<parallel>], iteration_bounds = array<i64: 1, 1>, scalar_prefetch = 0 : i64, scratch_operands = 0 : i64, tpu.core_type = #tpu.core_type<tc>, window_params = [{transform_indices = @transform_0, window_bounds = array<i64: 16, 128>}, {transform_indices = @transform_1, window_bounds = array<i64: 3, 128>}, {transform_indices = @transform_2, window_bounds = array<i64: 16, 128>}]} {
    %c0 = arith.constant 0 : index
    %c0_0 = arith.constant 0 : index
    %0 = vector.load %arg2[%c0, %c0_0] : memref<16x128xf32, #tpu.memory_space<vmem>>, vector<16x128xf32>
    %c0_1 = arith.constant 0 : index
    %c0_2 = arith.constant 0 : index
    %1 = vector.load %arg3[%c0_1, %c0_2] : memref<3x128xf32, #tpu.memory_space<vmem>>, vector<3x128xf32>
    %2 = vector.extract_strided_slice %1 {offsets = [0, 0], sizes = [1, 128], strides = [1, 1]} : vector<3x128xf32> to vector<1x128xf32>
    %3 = vector.extract_strided_slice %1 {offsets = [1, 0], sizes = [1, 128], strides = [1, 1]} : vector<3x128xf32> to vector<1x128xf32>
    %4 = vector.extract_strided_slice %1 {offsets = [2, 0], sizes = [1, 128], strides = [1, 1]} : vector<3x128xf32> to vector<1x128xf32>
    %5 = vector.broadcast %3 : vector<1x128xf32> to vector<16x128xf32>
    %6 = arith.subf %0, %5 : vector<16x128xf32>
    %7 = vector.broadcast %2 : vector<1x128xf32> to vector<16x128xf32>
    %8 = arith.mulf %6, %7 : vector<16x128xf32>
    %9 = vector.broadcast %4 : vector<1x128xf32> to vector<16x128xf32>
    %10 = arith.addf %8, %9 : vector<16x128xf32>
    %c0_3 = arith.constant 0 : index
    %c0_4 = arith.constant 0 : index
    %11 = vector.load %arg4[%c0_3, %c0_4] : memref<16x128xf32, #tpu.memory_space<vmem>>, vector<16x128xf32>
    tpu.vector_store %arg4[%c0_3, %c0_4], %10 {strides = array<i32>} : memref<16x128xf32, #tpu.memory_space<vmem>>, vector<16x128xf32>,
    return
  }
  func.func @transform_0(%arg0: i32, %arg1: i32) -> (i32, i32) {
    %c0_i32 = arith.constant 0 : i32
    return %arg0, %arg1 : i32, i32
  }
  func.func @transform_1(%arg0: i32, %arg1: i32) -> (i32, i32) {
    %c0_i32 = arith.constant 0 : i32
    %c0_i32_0 = arith.constant 0 : i32
    return %c0_i32, %arg1 : i32, i32
  }
  func.func @transform_2(%arg0: i32, %arg1: i32) -> (i32, i32) {
    %c0_i32 = arith.constant 0 : i32
    return %arg0, %arg1 : i32, i32
  }
}

</mosaic_0001>

<llo_original>
// kernel: tpu_custom_call.1
$region0: #{tpu_custom_call.1}
  #allocation0 [shape = 'u32[]', space=smem, size = 0x4, offset = 0x4, fixed_abs, tag = 'smem constant byte address 0x4 - core index']
  #allocation1 [shape = 'u32[72,128]{1,0:T(1,128)}', space=vmem, size = 0x9000, scoped, tag = 'internal scratch']
  %s0 = inlined_call_operand.hbm [shape: f32[16,128], index: 0, kind: input, shape index: {}]
  %s1 = inlined_call_operand.hbm [shape: f32[3,128], index: 1, kind: input, shape index: {}]
  %s2 = inlined_call_operand.hbm [shape: f32[16,128], index: 2, kind: output, shape index: {}]
  %s3 = sld [smem:[#allocation0]]
  $region26: #{tpu_custom_call.1} parent=0
    _
  %s5 = ssub.s32 1, %s3
  %s6 = scalar_select 0, %s5, %s3
  $region1: #{tpu_custom_call.1} parent=0
    #allocation2 [shape = 'u8[8192]{0}', space=vmem, size = 0x2000, scoped, tag = 'input window, operand 0, single buffered']
    #allocation3 [shape = 's32[1]{0}', space=sflag, size = 0x4, scoped, tag = 'scoped memory for tpu_custom_call.1']
    #allocation4 [shape = 's32[1]{0}', space=sflag, size = 0x4, scoped, tag = 'scoped memory for tpu_custom_call.1']
    #allocation5 [shape = 'u8[2048]{0}', space=vmem, size = 0x800, scoped, tag = 'input window, operand 1, single buffered']
    #allocation6 [shape = 's32[1]{0}', space=sflag, size = 0x4, scoped, tag = 'scoped memory for tpu_custom_call.1']
    #allocation7 [shape = 'u8[8192]{0}', space=vmem, size = 0x2000, scoped, tag = 'output window, operand 0, single buffered']
    %7 = vsyncpa [#allocation3], 0
    %8 = vsyncpa [#allocation6], 0
    %9 = vsyncpa [#allocation4], 0
    // Predicated region
    $region2: #{tpu_custom_call.1} parent=1 // pred_check
      _
    $region3: #{tpu_custom_call.1} parent=1 // pred_check_branch
      %11 = sbr.rel (0) target = $region5
    $region4: #{tpu_custom_call.1} parent=1 // pred_region
      %13 = vsyncadd [#allocation3], 0
      %s14 = sshll.u32 %s0, 4
      %s15 = int_to_ptr.hbm [resolvable:$true] %s14
      %s16 = sshll.u32 [#allocation2], 4
      %s17 = int_to_ptr.vmem [resolvable:$true] %s16
      %22 = dma.hbm_to_vmem [thread:$0]  %s15, 256, %s17, [#allocation3], 128, 128, 8
    $region5: #{tpu_custom_call.1} parent=1 // pred_fallthru
      _
    // Predicated region
    $region6: #{tpu_custom_call.1} parent=1 // pred_check
      _
    $region7: #{tpu_custom_call.1} parent=1 // pred_check_branch
      %24 = sbr.rel (0) target = $region9
    $region8: #{tpu_custom_call.1} parent=1 // pred_region
      %26 = vsyncadd [#allocation6], 0
      %s28 = sshll.u32 %s1, 4
      %s29 = int_to_ptr.hbm [resolvable:$true] %s28
      %s30 = sshll.u32 [#allocation5], 4
      %s31 = int_to_ptr.vmem [resolvable:$true] %s30
      %33 = dma.hbm_to_vmem [thread:$0]  %s29, 64, %s31, [#allocation6]
    $region9: #{tpu_custom_call.1} parent=1 // pred_fallthru
      _
    // Predicated region
    $region10: #{tpu_custom_call.1} parent=1 // pred_check
      _
    $region11: #{tpu_custom_call.1} parent=1 // pred_check_branch
      %35 = sbr.rel (0) target = $region13
    $region12: #{tpu_custom_call.1} parent=1 // pred_region
      %37 = dma.done [#allocation3], 256
    $region13: #{tpu_custom_call.1} parent=1 // pred_fallthru
      _
    // Predicated region
    $region14: #{tpu_custom_call.1} parent=1 // pred_check
      _
    $region15: #{tpu_custom_call.1} parent=1 // pred_check_branch
      %39 = sbr.rel (0) target = $region17
    $region16: #{tpu_custom_call.1} parent=1 // pred_region
      %41 = dma.done [#allocation6], 64
    $region17: #{tpu_custom_call.1} parent=1 // pred_fallthru
      _
    %v42 = vld [vmem:[#allocation2] sm:$0xff]
    %v43 = vld [vmem:[#allocation2 + $0x8] sm:$0xff]
    %v44 = vld [vmem:[#allocation5] sm:$0x7]
    %v45 = vperm.slane %v44, 1
    %v46 = vsub.f32 %v42, %v45
    %v47 = vsub.f32 %v43, %v45
    %v48 = vperm.slane %v44, 0
    %v49 = vmul.f32 %v46, %v48
    %v50 = vmul.f32 %v47, %v48
    %v51 = vperm.slane %v44, 2
    %v52 = vadd.f32 %v49, %v51
    %v53 = vadd.f32 %v50, %v51
    %54 = vst [vmem:[#allocation7] sm:$0xff] %v52
    %55 = vst [vmem:[#allocation7 + $0x8] sm:$0xff] %v53
    // Predicated region
    $region18: #{tpu_custom_call.1} parent=1 // pred_check
      _
    $region19: #{tpu_custom_call.1} parent=1 // pred_check_branch
      %57 = sbr.rel (0) target = $region21
    $region20: #{tpu_custom_call.1} parent=1 // pred_region
      %59 = vsyncadd [#allocation4], 0
      %s60 = sshll.u32 [#allocation7], 4
      %s61 = int_to_ptr.vmem [resolvable:$true] %s60
      %s62 = sshll.u32 %s2, 4
      %s63 = int_to_ptr.hbm [resolvable:$true] %s62
      %68 = dma.vmem_to_hbm [thread:$0]  %s61, 256, %s63, [#allocation4], 128, 128, 8
    $region21: #{tpu_custom_call.1} parent=1 // pred_fallthru
      _
    // Predicated region
    $region22: #{tpu_custom_call.1} parent=1 // pred_check
      _
    $region23: #{tpu_custom_call.1} parent=1 // pred_check_branch
      %70 = sbr.rel (0) target = $region25
    $region24: #{tpu_custom_call.1} parent=1 // pred_region
      %72 = dma.done [#allocation4], 256
    $region25: #{tpu_custom_call.1} parent=1 // pred_fallthru
      _
    %73 = vsyncpa [#allocation3], 1
    %74 = vsyncpa [#allocation6], 1
    %75 = vsyncpa [#allocation4], 1

</llo_original>
